<compile_context>
chip_gen: v7x
topology: tpu7x:2x2x1
jax: 0.10.0
libtpu: 0.0.40
codegen_flags: <defaults>
</compile_context>

<pallas_src>
import functools

import jax
import jax.numpy as jnp
from jax import lax
from jax.experimental import pallas as pl
from jax.experimental.pallas import tpu as pltpu


def _round_up(x, m):
    return ((x + m - 1) // m) * m


def _vmem_capacity_bytes(default=64 << 20):
    """Physical per-core VMEM, with a conservative (v7x-sized) fallback."""
    try:
        info = pltpu.get_tpu_info()
        cap = getattr(info, "vmem_capacity_bytes", None)
        if cap:
            return int(cap)
    except Exception:
        pass
    return default


def _causal_conv1d_kernel(x_ref, w_ref, b_ref, o_ref, *scratch,
                          kernel_size, dilation, pad, compute_dtype):
    """One (batch, time-tile) grid step.

    x_ref : (1, C_in, T_tile)        current time tile (input dtype, cast here)
    w_ref : (C_out_p, K*C_in)        weight, tap-major columns
    b_ref : (C_out_p, 1)             bias (f32)
    o_ref : (1, C_out_p, T_tile)     output tile
    scratch (only when pad > 0):
      im2col_ref : (K*C_in, T_tile)  stacked tap operand (compute_dtype)
      halo_ref   : (C_in, pad_lane)  carried last `pad` columns of prev tile
    """
    t_tile = o_ref.shape[-1]
    c_in = x_ref.shape[1]

    cur = x_ref[0].astype(compute_dtype)                       # (C_in, T_tile)

    if pad == 0:
        operand = cur                                          # 1x1 conv
    else:
        im2col_ref, halo_ref = scratch
        pad_lane = halo_ref.shape[-1]
        j = pl.program_id(1)

        # Zero the carried halo at the start of every batch's time loop
        # (this is the causal left zero-pad for the first tile).
        @pl.when(j == 0)
        def _():
            halo_ref[...] = jnp.zeros_like(halo_ref)

        halo = halo_ref[...]                                   # prev tile tail

        # Carry this tile's last `pad` columns to the next time step.
        # (Only meaningful when pad <= t_tile, which always holds whenever
        #  there is more than one time tile; harmless otherwise.)
        if pad <= t_tile:
            halo_ref[:, pad_lane - pad:] = cur[:, t_tile - pad:]

        # Build the im2col operand with sliced stores (no concatenates).
        # Row group `tap` holds x at global time (t - (K-1-tap)*dilation).
        for tap in range(kernel_size):
            off = (kernel_size - 1 - tap) * dilation           # static int
            r0 = tap * c_in
            if off == 0:
                im2col_ref[r0:r0 + c_in, :] = cur
            elif off >= t_tile:
                # Entire row group comes from the (zero / carried) halo.
                im2col_ref[r0:r0 + c_in, :] = (
                    halo[:, pad_lane - off: pad_lane - off + t_tile])
            else:
                im2col_ref[r0:r0 + c_in, 0:off] = halo[:, pad_lane - off:]
                im2col_ref[r0:r0 + c_in, off:t_tile] = cur[:, 0:t_tile - off]

        operand = im2col_ref[...]

    acc = jnp.dot(w_ref[...], operand,
                  preferred_element_type=jnp.float32)          # (C_out_p, T_tile)
    o_ref[0, :, :] = (acc + b_ref[...]).astype(o_ref.dtype)


def causal_conv1d(x, weight, bias=None, *, dilation=1,
                  out_dtype=jnp.bfloat16, compute_dtype=jnp.bfloat16,
                  max_time_tile=None):
    """Causal dilated Conv1d (PyTorch CausalConv1d.forward semantics).

    Args:
      x:      (B, C_in, T)
      weight: (C_out, C_in, K)
      bias:   (C_out,) or None
      dilation: int
      out_dtype: output dtype (default bf16; set jnp.float32 for fp32 output).
      compute_dtype: MXU operand dtype (f32 accumulation always).

    Returns:
      (B, C_out, T) in out_dtype.
    """
    b, c_in, t = x.shape
    c_out, c_in_w, k = weight.shape
    assert c_in == c_in_w
    pad = (k - 1) * dilation
    pad_lane = _round_up(pad, 128) if pad > 0 else 0

    out_dtype = jnp.dtype(out_dtype)
    compute_dtype = jnp.dtype(compute_dtype)
    x_bytes = jnp.dtype(x.dtype).itemsize
    cdt_bytes = compute_dtype.itemsize
    out_bytes = out_dtype.itemsize

    # Pad C_out to the output dtype's sublane-pack multiple (unmasked stores).
    sublane_mult = 8 * max(1, 4 // out_bytes)      # 8 for f32, 16 for bf16
    c_out_p = _round_up(c_out, sublane_mult)

    vmem_cap = _vmem_capacity_bytes()

    def est(tt):
        x_blk = c_in * tt * x_bytes
        out_blk = c_out_p * tt * out_bytes
        im2col = (k * c_in) * tt * cdt_bytes if pad > 0 else 0
        halo = c_in * pad_lane * cdt_bytes
        w_b = c_out_p * max(k * c_in, 128) * cdt_bytes
        b_b = c_out_p * 128 * 4
        acc = c_out_p * tt * 4
        # x / out blocks are double-buffered by the pipeline; weight resident.
        return 2 * (x_blk + out_blk) + im2col + halo + 2 * (w_b + b_b) + acc

    # --- chip-aware time tile ------------------------------------------------
    if max_time_tile is None:
        max_time_tile = 2048 if vmem_cap <= (96 << 20) else 8192
    while max_time_tile > 512 and est(max_time_tile) > int(0.5 * vmem_cap):
        max_time_tile //= 2

    if t <= 128:
        t_tile = t                                  # full-dim block, single tile
        num_t = 1
    else:
        cap = max(max_time_tile, pad_lane, 128)
        num_t = -(-t // cap)
        t_tile = _round_up(-(-t // num_t), 128)     # balanced, 128-aligned
        if pad_lane:
            t_tile = max(t_tile, pad_lane)          # multi-tile needs t_tile >= pad
        num_t = -(-t // t_tile)

    # --- small parameter re-layout (weight/bias only; x is left untouched) ---
    w2d = weight.astype(compute_dtype).transpose(0, 2, 1).reshape(c_out, k * c_in)
    if bias is None:
        bias = jnp.zeros((c_out,), jnp.float32)
    b2d = bias.astype(jnp.float32).reshape(c_out, 1)
    if c_out_p != c_out:
        w2d = jnp.pad(w2d, ((0, c_out_p - c_out), (0, 0)))
        b2d = jnp.pad(b2d, ((0, c_out_p - c_out), (0, 0)))

    kernel = functools.partial(
        _causal_conv1d_kernel, kernel_size=k, dilation=dilation, pad=pad,
        compute_dtype=compute_dtype)

    in_specs = [
        pl.BlockSpec((1, c_in, t_tile), lambda i, j: (i, 0, j)),      # x tile
        pl.BlockSpec((c_out_p, k * c_in), lambda i, j: (0, 0)),       # weight
        pl.BlockSpec((c_out_p, 1), lambda i, j: (0, 0)),              # bias
    ]
    out_specs = pl.BlockSpec((1, c_out_p, t_tile), lambda i, j: (i, 0, j))

    scratch_shapes = []
    if pad > 0:
        scratch_shapes = [
            pltpu.VMEM((k * c_in, t_tile), compute_dtype),            # im2col
            pltpu.VMEM((c_in, pad_lane), compute_dtype),              # carried halo
        ]

    # Carried halo requires the time axis to run in order; batch stays parallel
    # so v7x's two TensorCores shard on batch.
    dim_sem = ("parallel", "arbitrary") if pad > 0 else ("parallel", "parallel")

    vmem_limit = int(min(max(int(1.5 * est(t_tile)) + (8 << 20), 32 << 20),
                         int(0.9 * vmem_cap)))

    y = pl.pallas_call(
        kernel,
        out_shape=jax.ShapeDtypeStruct((b, c_out_p, t), out_dtype),
        grid_spec=pltpu.PrefetchScalarGridSpec(
            num_scalar_prefetch=0,
            grid=(b, num_t),
            in_specs=in_specs,
            out_specs=out_specs,
            scratch_shapes=scratch_shapes,
        ),
        compiler_params=pltpu.CompilerParams(
            dimension_semantics=dim_sem,
            vmem_limit_bytes=vmem_limit,
        ),
    )(x, w2d, b2d)

    if c_out_p != c_out:
        y = y[:, :c_out, :]
    return y


def _reference(x, weight, bias, dilation, precision=None):
    """Pure-JAX reference matching PyTorch CausalConv1d.forward."""
    k = weight.shape[-1]
    pad = (k - 1) * dilation
    x_pad = jnp.pad(x, ((0, 0), (0, 0), (pad, 0)))
    y = lax.conv_general_dilated(
        x_pad, weight,
        window_strides=(1,), padding="VALID",
        rhs_dilation=(dilation,),
        dimension_numbers=("NCH", "OIH", "NCH"),
        precision=precision)
    return y + bias.reshape(1, -1, 1)


if __name__ == "__main__":
    # Small deterministic config.
    B, C_IN, C_OUT, T = 2, 4, 6, 16
    K, DILATION = 3, 2

    key = jax.random.PRNGKey(0)
    kx, kw, kb, k2 = jax.random.split(key, 4)
    x = jax.random.normal(kx, (B, C_IN, T), dtype=jnp.float32)
    weight = 0.1 * jax.random.normal(kw, (C_OUT, C_IN, K), dtype=jnp.float32)
    bias = 0.1 * jax.random.normal(kb, (C_OUT,), dtype=jnp.float32)

    # f32 output path: tight check vs. a reference fed bf16-rounded inputs.
    y = jax.block_until_ready(
        causal_conv1d(x, weight, bias, dilation=DILATION, out_dtype=jnp.float32))
    assert y.shape == (B, C_OUT, T)

    xq = x.astype(jnp.bfloat16).astype(jnp.float32)
    wq = weight.astype(jnp.bfloat16).astype(jnp.float32)
    y_ref_q = _reference(xq, wq, bias, DILATION, precision=lax.Precision.HIGHEST)
    assert jnp.allclose(y, y_ref_q, atol=1e-3, rtol=1e-3)

    # Loose check vs. the full-fp32 reference (bf16 input quantization error).
    y_ref = _reference(x, weight, bias, DILATION, precision=lax.Precision.HIGHEST)
    assert jnp.allclose(y, y_ref, atol=2e-2, rtol=2e-2)

    # Multi-time-tile path (exercises the carried cross-tile causal halo and a
    # partial last block), default bf16 output.
    T2 = 300
    x2 = jax.random.normal(k2, (1, C_IN, T2), dtype=jnp.float32)
    y2 = jax.block_until_ready(
        causal_conv1d(x2, weight, bias, dilation=DILATION, max_time_tile=128))
    assert y2.shape == (1, C_OUT, T2)
    x2q = x2.astype(jnp.bfloat16).astype(jnp.float32)
    y2_ref = _reference(x2q, wq, bias, DILATION, precision=lax.Precision.HIGHEST)
    assert jnp.allclose(y2.astype(jnp.float32), y2_ref, atol=3e-2, rtol=3e-2)

    print("KERNEL_OK")
</pallas_src>

<mosaic_0001>
module attributes {stable_mosaic.version = 11 : i64} {
  func.func @_causal_conv1d_kernel(%arg0: i32, %arg1: i32, %arg2: memref<1x4x16xf32, #tpu.memory_space<vmem>>, %arg3: memref<8x12xbf16, #tpu.memory_space<vmem>>, %arg4: memref<8x1xf32, #tpu.memory_space<vmem>>, %arg5: memref<1x8x16xf32, #tpu.memory_space<vmem>>, %arg6: memref<12x16xbf16, #tpu.memory_space<vmem>>, %arg7: memref<4x128xbf16, #tpu.memory_space<vmem>>) attributes {dimension_semantics = [#tpu.dimension_semantics<parallel>, #tpu.dimension_semantics<arbitrary>], iteration_bounds = array<i64: 2, 1>, scalar_prefetch = 0 : i64, scratch_operands = 2 : i64, tpu.core_type = #tpu.core_type<tc>, window_params = [{transform_indices = @transform_0, window_bounds = array<i64: 1, 4, 16>}, {pipeline_mode = #tpu.pipeline_mode<synchronous>, transform_indices = @transform_1, window_bounds = array<i64: 8, 12>}, {pipeline_mode = #tpu.pipeline_mode<synchronous>, transform_indices = @transform_2, window_bounds = array<i64: 8, 1>}, {transform_indices = @transform_3, window_bounds = array<i64: 1, 8, 16>}]} {
    %c0 = arith.constant 0 : index
    %c0_0 = arith.constant 0 : index
    %c0_1 = arith.constant 0 : index
    %0 = vector.load %arg2[%c0, %c0_0, %c0_1] : memref<1x4x16xf32, #tpu.memory_space<vmem>>, vector<1x4x16xf32>
    %1 = vector.shape_cast %0 : vector<1x4x16xf32> to vector<4x16xf32>
    %2 = arith.truncf %1 : vector<4x16xf32> to vector<4x16xbf16>
    %c0_i32 = arith.constant 0 : i32
    %3 = arith.cmpi eq, %arg1, %c0_i32 : i32
    %4 = arith.extui %3 : i1 to i32
    %c0_i32_2 = arith.constant 0 : i32
    %5 = arith.cmpi ne, %4, %c0_i32_2 : i32
    scf.if %5 {
      %cst_22 = arith.constant 0.000000e+00 : bf16
      %27 = vector.broadcast %cst_22 : bf16 to vector<4x128xbf16>
      %c0_23 = arith.constant 0 : index
      %c0_24 = arith.constant 0 : index
      %28 = vector.load %arg7[%c0_23, %c0_24] : memref<4x128xbf16, #tpu.memory_space<vmem>>, vector<4x128xbf16>
      tpu.vector_store %arg7[%c0_23, %c0_24], %27 {strides = array<i32>} : memref<4x128xbf16, #tpu.memory_space<vmem>>, vector<4x128xbf16>,
    } else {
    }
    %c0_3 = arith.constant 0 : index
    %c0_4 = arith.constant 0 : index
    %6 = vector.load %arg7[%c0_3, %c0_4] : memref<4x128xbf16, #tpu.memory_space<vmem>>, vector<4x128xbf16>
    %7 = vector.extract_strided_slice %2 {offsets = [0, 12], sizes = [4, 4], strides = [1, 1]} : vector<4x16xbf16> to vector<4x4xbf16>
    %c0_5 = arith.constant 0 : index
    %c124 = arith.constant 124 : index
    %8 = vector.load %arg7[%c0_5, %c124] : memref<4x128xbf16, #tpu.memory_space<vmem>>, vector<4x4xbf16>
    tpu.vector_store %arg7[%c0_5, %c124], %7 {strides = array<i32>} : memref<4x128xbf16, #tpu.memory_space<vmem>>, vector<4x4xbf16>,
    %9 = vector.extract_strided_slice %6 {offsets = [0, 124], sizes = [4, 4], strides = [1, 1]} : vector<4x128xbf16> to vector<4x4xbf16>
    %c0_6 = arith.constant 0 : index
    %c0_7 = arith.constant 0 : index
    %10 = vector.load %arg6[%c0_6, %c0_7] : memref<12x16xbf16, #tpu.memory_space<vmem>>, vector<4x4xbf16>
    tpu.vector_store %arg6[%c0_6, %c0_7], %9 {strides = array<i32>} : memref<12x16xbf16, #tpu.memory_space<vmem>>, vector<4x4xbf16>,
    %11 = vector.extract_strided_slice %2 {offsets = [0, 0], sizes = [4, 12], strides = [1, 1]} : vector<4x16xbf16> to vector<4x12xbf16>
    %c0_8 = arith.constant 0 : index
    %c4 = arith.constant 4 : index
    %12 = vector.load %arg6[%c0_8, %c4] : memref<12x16xbf16, #tpu.memory_space<vmem>>, vector<4x12xbf16>
    tpu.vector_store %arg6[%c0_8, %c4], %11 {strides = array<i32>} : memref<12x16xbf16, #tpu.memory_space<vmem>>, vector<4x12xbf16>,
    %13 = vector.extract_strided_slice %6 {offsets = [0, 126], sizes = [4, 2], strides = [1, 1]} : vector<4x128xbf16> to vector<4x2xbf16>
    %c4_9 = arith.constant 4 : index
    %c0_10 = arith.constant 0 : index
    %14 = vector.load %arg6[%c4_9, %c0_10] : memref<12x16xbf16, #tpu.memory_space<vmem>>, vector<4x2xbf16>
    tpu.vector_store %arg6[%c4_9, %c0_10], %13 {strides = array<i32>} : memref<12x16xbf16, #tpu.memory_space<vmem>>, vector<4x2xbf16>,
    %15 = vector.extract_strided_slice %2 {offsets = [0, 0], sizes = [4, 14], strides = [1, 1]} : vector<4x16xbf16> to vector<4x14xbf16>
    %c4_11 = arith.constant 4 : index
    %c2 = arith.constant 2 : index
    %16 = vector.load %arg6[%c4_11, %c2] : memref<12x16xbf16, #tpu.memory_space<vmem>>, vector<4x14xbf16>
    tpu.vector_store %arg6[%c4_11, %c2], %15 {strides = array<i32>} : memref<12x16xbf16, #tpu.memory_space<vmem>>, vector<4x14xbf16>,
    %c8 = arith.constant 8 : index
    %c0_12 = arith.constant 0 : index
    %17 = vector.load %arg6[%c8, %c0_12] : memref<12x16xbf16, #tpu.memory_space<vmem>>, vector<4x16xbf16>
    tpu.vector_store %arg6[%c8, %c0_12], %2 {strides = array<i32>} : memref<12x16xbf16, #tpu.memory_space<vmem>>, vector<4x16xbf16>,
    %c0_13 = arith.constant 0 : index
    %c0_14 = arith.constant 0 : index
    %18 = vector.load %arg6[%c0_13, %c0_14] : memref<12x16xbf16, #tpu.memory_space<vmem>>, vector<12x16xbf16>
    %c0_15 = arith.constant 0 : index
    %c0_16 = arith.constant 0 : index
    %19 = vector.load %arg3[%c0_15, %c0_16] : memref<8x12xbf16, #tpu.memory_space<vmem>>, vector<8x12xbf16>
    %cst = arith.constant dense<0.000000e+00> : vector<8x16xf32>
    %20 = tpu.matmul %19, %18, %cst {dimension_numbers = #tpu.dot_dimension_numbers<[1], [0], [0], [1], [0, 0, 1, 1], [], []>} : vector<8x12xbf16>, vector<12x16xbf16>, vector<8x16xf32> -> vector<8x16xf32>
    %c0_17 = arith.constant 0 : index
    %c0_18 = arith.constant 0 : index
    %21 = vector.load %arg4[%c0_17, %c0_18] : memref<8x1xf32, #tpu.memory_space<vmem>>, vector<8x1xf32>
    %22 = vector.broadcast %21 : vector<8x1xf32> to vector<8x16xf32>
    %23 = arith.addf %20, %22 : vector<8x16xf32>
    %c0_19 = arith.constant 0 : index
    %c0_20 = arith.constant 0 : index
    %c0_21 = arith.constant 0 : index
    %24 = vector.load %arg5[%c0_19, %c0_20, %c0_21] : memref<1x8x16xf32, #tpu.memory_space<vmem>>, vector<1x8x16xf32>
    %25 = vector.shape_cast %24 : vector<1x8x16xf32> to vector<8x16xf32>
    %26 = vector.shape_cast %23 : vector<8x16xf32> to vector<1x8x16xf32>
    tpu.vector_store %arg5[%c0_19, %c0_20, %c0_21], %26 {strides = array<i32>} : memref<1x8x16xf32, #tpu.memory_space<vmem>>, vector<1x8x16xf32>,
    return
  }
  func.func @transform_0(%arg0: i32, %arg1: i32) -> (i32, i32, i32) {
    %c0_i32 = arith.constant 0 : i32
    %c0_i32_0 = arith.constant 0 : i32
    return %arg0, %c0_i32, %arg1 : i32, i32, i32
  }
  func.func @transform_1(%arg0: i32, %arg1: i32) -> (i32, i32) {
    %c0_i32 = arith.constant 0 : i32
    %c0_i32_0 = arith.constant 0 : i32
    %c0_i32_1 = arith.constant 0 : i32
    return %c0_i32, %c0_i32_0 : i32, i32
  }
  func.func @transform_2(%arg0: i32, %arg1: i32) -> (i32, i32) {
    %c0_i32 = arith.constant 0 : i32
    %c0_i32_0 = arith.constant 0 : i32
    %c0_i32_1 = arith.constant 0 : i32
    return %c0_i32, %c0_i32_0 : i32, i32
  }
  func.func @transform_3(%arg0: i32, %arg1: i32) -> (i32, i32, i32) {
    %c0_i32 = arith.constant 0 : i32
    %c0_i32_0 = arith.constant 0 : i32
    return %arg0, %c0_i32, %arg1 : i32, i32, i32
  }
}

</mosaic_0001>

<llo_original>
// kernel: tpu_custom_call.1
$region0: #{tpu_custom_call.1}
  #allocation0 [shape = 'u32[]', space=smem, size = 0x4, offset = 0x4, fixed_abs, tag = 'smem constant byte address 0x4 - core index']
  #allocation1 [shape = 'u32[144,128]{1,0:T(1,128)}', space=vmem, size = 0x12000, scoped, tag = 'internal scratch']
  #allocation2 [shape = 'bf16[12,16]{1,0:T(8,128)(2,1)}', space=vmem, size = 0x1000, scoped, tag = 'scratch operand']
  #allocation3 [shape = 'bf16[4,128]{1,0:T(4,128)(2,1)}', space=vmem, size = 0x400, scoped, tag = 'scratch operand']
  %s0 = inlined_call_operand.vmem [shape: f32[2,4,16], index: 0, kind: input, shape index: {}]
  %s1 = inlined_call_operand.vmem [shape: bf16[8,12], index: 1, kind: input, shape index: {}]
  %s2 = inlined_call_operand.vmem [shape: f32[8,1], index: 2, kind: input, shape index: {}]
  %s3 = inlined_call_operand.hbm [shape: f32[2,8,16], index: 3, kind: output, shape index: {}]
  %s4 = sld [smem:[#allocation0]]
  $region49: #{tpu_custom_call.1} parent=0
    _
  %s6 = ssub.s32 1, %s4
  %s7 = scalar_select 0, %s6, %s4
  $region1: #{tpu_custom_call.1} parent=0
    #allocation4 [shape = 'u8[8192]{0}', space=vmem, size = 0x2000, scoped, tag = 'output window, operand 0']
    #allocation5 [shape = 's32[2]{0}', space=sflag, size = 0x8, scoped, tag = 'scoped memory for tpu_custom_call.1']
    %8 = vsyncpa [#allocation5], 0
    %s9 = scalar_lea.sflag [#allocation5], 1
    %10 = vsyncpa %s9, 0
    loop: start=0, step=1, limit=4
    $region2: #{tpu_custom_call.1} parent=1 // loop_pre_header
      _
    $region3: #{tpu_custom_call.1} parent=1 // loop_header
      %s12 = sphi 0, %s16
      %p13 = scmp.ge.s32.totalorder %s12, 4
      %s19 = sphi 0, %s31
      %s20 = sphi 0, %s27
      %s21 = sphi 0, %s19
      %s22 = sphi 0, %s20
      %s23 = sphi 0, %s21
      %s24 = sphi 0, %s22
      %s36 = sphi 0, %s38
      %s39 = sphi 0, %s36
      %s40 = sphi 0, %s39
      %s56 = sphi 0, %s40
      %s60 = sphi 0, %s60
      %s62 = sphi 0, %s60
      %s63 = sphi 0, %s62
      %s77 = sphi 0, %s63
      %s81 = sphi 0, %s81
      %s83 = sphi 0, %s81
      %s84 = sphi 0, %s83
      %s98 = sphi 0, %s84
      %s106 = sphi 0, %s108
      %s109 = sphi 0, %s106
      %s110 = sphi 0, %s109
      %s126 = sphi 0, %s110
    $region4: #{tpu_custom_call.1} parent=1 // loop_header_branch
      %15 = sbr.rel (%p13) target = $region8
    $region5: #{tpu_custom_call.1} parent=1 // loop_body
      %s17 = ssub.s32 %s12, 1
      %s18 = ssub.s32 %s12, 2
      %s25 = sadd.s32 1, %s20
      %p26 = scmp.ge.s32.totalorder %s25, 1
      %s27 = scalar_select %p26, 0, %s25
      %s28 = sadd.s32 1, %s19
      %s29 = scalar_select %p26, %s28, %s19
      %p30 = scmp.ge.s32.totalorder %s29, 2
      %s31 = scalar_select %p30, 0, %s29
      %s32 = ssub.s32 %s19, %s31
      %s33 = ssub.s32 %s20, %s27
      %s34 = sor.u32 %s32, %s33
      %p35 = scmp.eq.s32.totalorder %s34, 0
      %s37 = sadd.s32 %s36, 1
      %s38 = scalar_select %p35, %s36, %s37
      %p41 = pneg %p35
      %p42 = scmp.eq.s32.totalorder %s12, 1
      %p43 = por %p41, %p42
      %p44 = scmp.ne.s32.totalorder %s36, %s39
      %p45 = scmp.eq.s32.totalorder %s12, 0
      %p46 = por %p44, %p45
      %p47 = scmp.ne.s32.totalorder %s36, %s39
      %p48 = scmp.eq.s32.totalorder %s17, 1
      %p49 = por %p47, %p48
      %p50 = scmp.ne.s32.totalorder %s39, %s40
      %p51 = scmp.eq.s32.totalorder %s17, 0
      %p52 = por %p50, %p51
      %p53 = scmp.ne.s32.totalorder %s39, %s40
      %p54 = scmp.eq.s32.totalorder %s18, 1
      %p55 = por %p53, %p54
      %p57 = scmp.ne.s32.totalorder %s40, %s56
      %p58 = scmp.eq.s32.totalorder %s18, 0
      %p59 = por %p57, %p58
      %s61 = sadd.s32 %s60, 1
      %p64 = scmp.eq.s32.totalorder %s12, 1
      %p65 = scmp.ne.s32.totalorder %s60, %s62
      %p66 = scmp.eq.s32.totalorder %s12, 0
      %p67 = por %p65, %p66
      %p68 = scmp.ne.s32.totalorder %s60, %s62
      %p69 = scmp.eq.s32.totalorder %s17, 1
      %p70 = por %p68, %p69
      %p71 = scmp.ne.s32.totalorder %s62, %s63
      %p72 = scmp.eq.s32.totalorder %s17, 0
      %p73 = por %p71, %p72
      %p74 = scmp.ne.s32.totalorder %s62, %s63
      %p75 = scmp.eq.s32.totalorder %s18, 1
      %p76 = por %p74, %p75
      %p78 = scmp.ne.s32.totalorder %s63, %s77
      %p79 = scmp.eq.s32.totalorder %s18, 0
      %p80 = por %p78, %p79
      %s82 = sadd.s32 %s81, 1
      %p85 = scmp.eq.s32.totalorder %s12, 1
      %p86 = scmp.ne.s32.totalorder %s81, %s83
      %p87 = scmp.eq.s32.totalorder %s12, 0
      %p88 = por %p86, %p87
      %p89 = scmp.ne.s32.totalorder %s81, %s83
      %p90 = scmp.eq.s32.totalorder %s17, 1
      %p91 = por %p89, %p90
      %p92 = scmp.ne.s32.totalorder %s83, %s84
      %p93 = scmp.eq.s32.totalorder %s17, 0
      %p94 = por %p92, %p93
      %p95 = scmp.ne.s32.totalorder %s83, %s84
      %p96 = scmp.eq.s32.totalorder %s18, 1
      %p97 = por %p95, %p96
      %p99 = scmp.ne.s32.totalorder %s84, %s98
      %p100 = scmp.eq.s32.totalorder %s18, 0
      %p101 = por %p99, %p100
      %s102 = ssub.s32 %s19, %s31
      %s103 = ssub.s32 %s20, %s27
      %s104 = sor.u32 %s102, %s103
      %p105 = scmp.eq.s32.totalorder %s104, 0
      %s107 = sadd.s32 %s106, 1
      %s108 = scalar_select %p105, %s106, %s107
      %p111 = pneg %p105
      %p112 = scmp.eq.s32.totalorder %s12, 1
      %p113 = por %p111, %p112
      %p114 = scmp.ne.s32.totalorder %s106, %s109
      %p115 = scmp.eq.s32.totalorder %s12, 0
      %p116 = por %p114, %p115
      %p117 = scmp.ne.s32.totalorder %s106, %s109
      %p118 = scmp.eq.s32.totalorder %s17, 1
      %p119 = por %p117, %p118
      %p120 = scmp.ne.s32.totalorder %s109, %s110
      %p121 = scmp.eq.s32.totalorder %s17, 0
      %p122 = por %p120, %p121
      %p123 = scmp.ne.s32.totalorder %s109, %s110
      %p124 = scmp.eq.s32.totalorder %s18, 1
      %p125 = por %p123, %p124
      %p127 = scmp.ne.s32.totalorder %s110, %s126
      %p128 = scmp.eq.s32.totalorder %s18, 0
      %p129 = por %p127, %p128
      %p130 = scmp.le.s32.totalorder 1, %s12
      %p131 = scmp.lt.s32.totalorder %s12, 3
      %p132 = pnand %p130, %p131
      %p133 = pneg %p132
      // Predicated region
      $region9: #{tpu_custom_call.1} parent=5 // pred_check
        _
      $region10: #{tpu_custom_call.1} parent=5 // pred_check_branch
        %135 = sbr.rel (%p132) target = $region12
      $region11: #{tpu_custom_call.1} parent=5 // pred_region
        %s136 = ssub.s32 %s12, 1
        // Predicated region
        $region13: #{tpu_custom_call.1} parent=11 // pred_check
          %p137 = pneg %p73
        $region14: #{tpu_custom_call.1} parent=11 // pred_check_branch
          %139 = sbr.rel (%p137) target = $region16
        $region15: #{tpu_custom_call.1} parent=11 // pred_region
          _
        $region16: #{tpu_custom_call.1} parent=11 // pred_fallthru
          _
        // Predicated region
        $region17: #{tpu_custom_call.1} parent=11 // pred_check
          %p140 = pneg %p94
        $region18: #{tpu_custom_call.1} parent=11 // pred_check_branch
          %142 = sbr.rel (%p140) target = $region20
        $region19: #{tpu_custom_call.1} parent=11 // pred_region
          _
        $region20: #{tpu_custom_call.1} parent=11 // pred_fallthru
          _
      $region12: #{tpu_custom_call.1} parent=5 // pred_fallthru
        _
      %p143 = scmp.lt.s32.totalorder %s12, 2
      // Predicated region
      $region21: #{tpu_custom_call.1} parent=5 // pred_check
        %p144 = pneg %p143
      $region22: #{tpu_custom_call.1} parent=5 // pred_check_branch
        %146 = sbr.rel (%p144) target = $region24
      $region23: #{tpu_custom_call.1} parent=5 // pred_region
        // Predicated region
        $region25: #{tpu_custom_call.1} parent=23 // pred_check
          %p147 = pneg %p46
        $region26: #{tpu_custom_call.1} parent=23 // pred_check_branch
          %149 = sbr.rel (%p147) target = $region28
        $region27: #{tpu_custom_call.1} parent=23 // pred_region
          %p150 = scmp.lt.s32.totalorder %s19, 1
          %s151 = scalar_select %p150, %s19, 1
          %p152 = scmp.lt.s32.totalorder %s20, 0
          %s153 = scalar_select %p152, %s20, 0
          %s154 = sadd.s32 %s153, %s151
          %s155 = smul.addr %s154, 4
          %s156 = scalar_lea.vmem %s0, %s155
        $region28: #{tpu_custom_call.1} parent=23 // pred_fallthru
          _
      $region24: #{tpu_custom_call.1} parent=5 // pred_fallthru
        _
      %p157 = scmp.le.s32.totalorder 1, %s12
      %p158 = scmp.lt.s32.totalorder %s12, 3
      %p159 = pnand %p157, %p158
      %p160 = pneg %p159
      // Predicated region
      $region29: #{tpu_custom_call.1} parent=5 // pred_check
        _
      $region30: #{tpu_custom_call.1} parent=5 // pred_check_branch
        %162 = sbr.rel (%p159) target = $region32
      $region31: #{tpu_custom_call.1} parent=5 // pred_region
        %s163 = ssub.s32 %s12, 1
        %p164 = scmp.lt.s32.totalorder %s21, 1
        %s165 = scalar_select %p164, %s21, 1
        %p166 = scmp.lt.s32.totalorder %s22, 0
        %s167 = scalar_select %p166, %s22, 0
        %s168 = sadd.s32 %s167, %s165
        %s169 = smul.addr %s168, 4
        %s170 = scalar_lea.vmem %s0, %s169
        %p171 = pneg %p52
        %p172 = pneg %p49
        %p173 = pneg %p73
        %p174 = pneg %p70
        %p175 = pneg %p94
        %p176 = pneg %p91
        %p177 = pneg %p122
        %p178 = pneg %p119
        %s179 = sand.u32 %s109, 1
        %s180 = scalar_lea.sflag [#allocation5], %s179
        %s181 = sand.u32 %s109, 1
        %s182 = smul.addr %s181, 8
        %s183 = scalar_lea.vmem [#allocation4], %s182
        %p184 = scmp.lt.s32.totalorder %s21, 1
        %s185 = scalar_select %p184, %s21, 1
        %p186 = scmp.lt.s32.totalorder %s22, 0
        %s187 = scalar_select %p186, %s22, 0
        %s188 = sadd.s32 %s187, %s185
        %s189 = smul.addr %s188, 4
        %s190 = scalar_lea.vmem %s0, %s189
        %v192 = vld [vmem:[%s190] sm:$0xf]
        %v193 = vpack.c.bf16 %v192, %v192
        %p194 = scmp.eq.s32.totalorder %s22, 0
        // Predicated region
        $region33: #{tpu_custom_call.1} parent=31 // pred_check
          %p195 = pneg %p194
        $region34: #{tpu_custom_call.1} parent=31 // pred_check_branch
          %197 = sbr.rel (%p195) target = $region36
        $region35: #{tpu_custom_call.1} parent=31 // pred_region
          %198 = vst [vmem:[#allocation3] sm:$0x3] 0
        $region36: #{tpu_custom_call.1} parent=31 // pred_fallthru
          _
        %v199 = vld [vmem:[#allocation3] sm:$0x3]
        %v202 = vunpack.c.l.s4 1983009808
        %v203 = vunpack.c.0.s8 %v202
        %v204 = vlaneseq
        %v205 = vshrl.u32 %v204, 7
        %v206 = vsub.s32 %v203, %v205
        %v207 = vrot.slane %v193, %v206
        %208 = vrot.lane.b32.xlu0 %v207, 112
        %v209 = vpop.permute.xlu0 %208
        %vm211 = vcmask 1042400
        %212 = vst.msk [vmem:[#allocation3] sm:$0x3] %vm211, %v209
        %v215 = vunpack.c.l.s4 1983009808
        %v216 = vunpack.c.0.s8 %v215
        %v217 = vlaneseq
        %v218 = vshrl.u32 %v217, 7
        %v219 = vsub.s32 %v216, %v218
        %v220 = vrot.slane %v199, %v219
        %221 = vrot.lane.b32.xlu0 %v220, 4
        %v222 = vpop.permute.xlu0 %221
        %vm224 = vcmask 25600
        %225 = vst.msk [vmem:[#allocation2] sm:$0x3] %vm224, %v222
        %v226 = vunpack.c.l.b16 %v193
        %v227 = vpack.c.b16 %v226, %v226
        %228 = vrot.lane.b32.xlu0 %v227, 4
        %v229 = vpop.permute.xlu0 %228
        %vm231 = vcmask 123936
        %232 = vst.msk [vmem:[#allocation2] sm:$0x3] %vm231, %v229
        %v233 = vcombine.low %v199, %v199
        %v235 = vunpack.c.l.s4 1983009808
        %v236 = vunpack.c.0.s8 %v235
        %v237 = vlaneseq
        %v238 = vshrl.u32 %v237, 7
        %v239 = vsub.s32 %v236, %v238
        %v240 = vrot.slane %v233, %v239
        %241 = vrot.lane.b32.xlu0 %v240, 2
        %v242 = vpop.permute.xlu0 %241
        %vm244 = vcmask 11266
        %245 = vst.msk [vmem:[#allocation2] sm:$0xc] %vm244, %v242
        %v246 = vrot.slane %v227, 6
        %247 = vrot.lane.b32.xlu0 %v246, 2
        %v248 = vpop.permute.xlu0 %247
        %vm250 = vcmask 125970
        %251 = vst.msk [vmem:[#allocation2] sm:$0xc] %vm250, %v248
        %vm252 = vcmask 123904
        %253 = vst.msk [vmem:[#allocation2 + $0x4] sm:$0x3] %vm252, %v193
        %v254 = vld [vmem:[#allocation2] sm:$0xf]
        %v255 = vld [vmem:[#allocation2 + $0x4] sm:$0x3]
        %v256 = vld [vmem:[%s1] sm:$0xf]
        %v257 = vld [vmem:[%s2] sm:$0xff]
        %259 = vset.pattern.permute.xlu0 0
        %260 = vperm.xlu0 %259, %v257
        %v261 = vpop.permute.xlu0 %260
        %v265 = vunpack.c.l.b16 %v254
        %v266 = vunpack.c.l.b16 %v255
        %v267 = vpack.c.b16 %v266, %v265
        %vm268 = vcmask 97280
        %v270 = vsel %vm268, %v256, 0
        %vm272 = vcmask 1045504
        %v274 = vsel %vm272, %v267, 0
        %276 = vmatprep.subr.bf16.mxu0 0
        %277 = vmatpush1.bf16.msra.mxu0 %v274
        %278 = vmatprep.subr.bf16.mxu0 0
        %279 = vmatpush1.bf16.msra.mxu0 0
        %280 = vmatprep.subr.bf16.mxu0 0
        %281 = vmatpush1.bf16.msra.mxu0 0
        %282 = vmatprep.subr.bf16.mxu0 0
        %283 = vmatpush1.bf16.msra.mxu0 0
        %284 = vmatprep.subr.bf16.mxu0 0
        %285 = vmatpush1.bf16.msra.mxu0 0
        %286 = vmatprep.subr.bf16.mxu0 0
        %287 = vmatpush1.bf16.msra.mxu0 0
        %288 = vmatprep.subr.bf16.mxu0 0
        %289 = vmatpush1.bf16.msra.mxu0 0
        %290 = vmatprep.subr.bf16.mxu0 0
        %291 = vmatpush1.bf16.msra.mxu0 0
        %292 = vmatprep.subr.bf16.mxu0 0
        %293 = vmatpush1.bf16.msra.mxu0 0
        %294 = vmatprep.subr.bf16.mxu0 0
        %295 = vmatpush1.bf16.msra.mxu0 0
        %296 = vmatprep.subr.bf16.mxu0 0
        %297 = vmatpush1.bf16.msra.mxu0 0
        %298 = vmatprep.subr.bf16.mxu0 0
        %299 = vmatpush1.bf16.msra.mxu0 0
        %300 = vmatprep.subr.bf16.mxu0 0
        %301 = vmatpush1.bf16.msra.mxu0 0
        %302 = vmatprep.subr.bf16.mxu0 0
        %303 = vmatpush1.bf16.msra.mxu0 0
        %304 = vmatprep.subr.bf16.mxu0 0
        %305 = vmatpush1.bf16.msra.mxu0 0
        %306 = vmatprep.subr.bf16.mxu0 0
        %307 = vmatpush1.bf16.msra.mxu0 0
        %308 = vmatprep.mubr.bf16.mxu0 0
        %309 = vmatmul.mubr.bf16.gmra.mrb[0].mxu0 %v270
        %v310 = vpop.f32.mrb[0].mxu0
        %v311 = vadd.f32 %v261, %v310
        %v312 = vpop.f32.mrb[0].mxu0
        %v313 = vpop.f32.mrb[0].mxu0
        %v314 = vpop.f32.mrb[0].mxu0
        %315 = vdwg.mxu0
        %vm316 = vcmask 130048
        %317 = vst.msk [vmem:[%s183] sm:$0xff] %vm316, %v311
        %s318 = sand.u32 %s109, 1
        %s319 = scalar_lea.sflag [#allocation5], %s318
        %s320 = sand.u32 %s109, 1
        %s321 = smul.addr %s320, 8
        %s322 = scalar_lea.vmem [#allocation4], %s321
        // Predicated region
        $region37: #{tpu_custom_call.1} parent=31 // pred_check
          %p323 = pneg %p119
        $region38: #{tpu_custom_call.1} parent=31 // pred_check_branch
          %325 = sbr.rel (%p323) target = $region40
        $region39: #{tpu_custom_call.1} parent=31 // pred_region
          %s327 = ssub.s32 128, 128
          %328 = vsyncadd %s319, %s327
          %s329 = sadd.s32 %s22, %s21
          %s330 = smul.addr %s329, 128
          %s331 = scalar_lea.hbm %s3, %s330
          %s333 = sshll.u32 %s322, 4
          %s334 = int_to_ptr.vmem [resolvable:$true] %s333
          %336 = dma.vmem_to_hbm [thread:$0]  %s334, 128, %s331, %s319
        $region40: #{tpu_custom_call.1} parent=31 // pred_fallthru
          _
      $region32: #{tpu_custom_call.1} parent=5 // pred_fallthru
        _
      %p337 = scmp.le.s32.totalorder 2, %s12
      // Predicated region
      $region41: #{tpu_custom_call.1} parent=5 // pred_check
        %p338 = pneg %p337
      $region42: #{tpu_custom_call.1} parent=5 // pred_check_branch
        %340 = sbr.rel (%p338) target = $region44
      $region43: #{tpu_custom_call.1} parent=5 // pred_region
        %s341 = ssub.s32 %s12, 2
        // Predicated region
        $region45: #{tpu_custom_call.1} parent=43 // pred_check
          %p342 = pneg %p125
        $region46: #{tpu_custom_call.1} parent=43 // pred_check_branch
          %344 = sbr.rel (%p342) target = $region48
        $region47: #{tpu_custom_call.1} parent=43 // pred_region
          %s345 = sand.u32 %s110, 1
          %s346 = scalar_lea.sflag [#allocation5], %s345
          %s347 = sand.u32 %s110, 1
          %s348 = smul.addr %s347, 8
          %s349 = scalar_lea.vmem [#allocation4], %s348
          %350 = dma.done %s346, 128
        $region48: #{tpu_custom_call.1} parent=43 // pred_fallthru
          _
      $region44: #{tpu_custom_call.1} parent=5 // pred_fallthru
        _
    $region6: #{tpu_custom_call.1} parent=1 // loop_footer
      %s16 = sadd.s32 1, %s12
    $region7: #{tpu_custom_call.1} parent=1 // loop_footer_branch
      %11 = sbr.rel target = $region3
    $region8: #{tpu_custom_call.1} parent=1 // loop_exit
      _
    %351 = vsyncpa [#allocation5], 1
    %s352 = scalar_lea.sflag [#allocation5], 1
    %353 = vsyncpa %s352, 1

</llo_original>
